<compile_context>
chip_gen: v7x
topology: tpu7x:2x2x1
jax: 0.10.0
libtpu: 0.0.40
codegen_flags: <defaults>
</compile_context>

<pallas_src>
import math
import functools

import jax
import jax.numpy as jnp
from jax import lax
from jax.experimental import pallas as pl
from jax.experimental.pallas import tpu as pltpu


# ----------------------------- kernels ------------------------------------ #

def _noisy_kernel_2d(x_ref, wmu_ref, wsig_ref, ein_ref, eout_ref,
                     bmu_ref, bsig_ref, beps_ref, o_ref, *, cast_bf16):
    # Whole reduction fits in one tile: no accumulator, direct store.
    # eps = eps_out[:, None] * eps_in[None, :];  w = w_mu + w_sigma * eps
    w = wmu_ref[...] + wsig_ref[...] * (eout_ref[...] * ein_ref[...])
    xv = x_ref[...]
    if cast_bf16:
        w = w.astype(jnp.bfloat16)
        xv = xv.astype(jnp.bfloat16)
    acc = lax.dot_general(
        xv, w,
        dimension_numbers=(((1,), (1,)), ((), ())),   # x @ w.T, no transpose op
        preferred_element_type=jnp.float32)
    b = bmu_ref[...] + bsig_ref[...] * beps_ref[...]  # (1, tn)
    o_ref[...] = (acc + b).astype(o_ref.dtype)


def _plain_kernel_2d(x_ref, wmu_ref, bmu_ref, o_ref, *, cast_bf16):
    w = wmu_ref[...]
    xv = x_ref[...]
    if cast_bf16:
        w = w.astype(jnp.bfloat16)
        xv = xv.astype(jnp.bfloat16)
    acc = lax.dot_general(
        xv, w,
        dimension_numbers=(((1,), (1,)), ((), ())),
        preferred_element_type=jnp.float32)
    o_ref[...] = (acc + bmu_ref[...]).astype(o_ref.dtype)


def _noisy_kernel_3d(x_ref, wmu_ref, wsig_ref, ein_ref, eout_ref,
                     bmu_ref, bsig_ref, beps_ref, o_ref, acc_ref, *, cast_bf16):
    k = pl.program_id(2)

    @pl.when(k == 0)
    def _():
        acc_ref[...] = jnp.zeros_like(acc_ref)

    w = wmu_ref[...] + wsig_ref[...] * (eout_ref[...] * ein_ref[...])
    xv = x_ref[...]
    if cast_bf16:
        w = w.astype(jnp.bfloat16)
        xv = xv.astype(jnp.bfloat16)

    acc_ref[...] += lax.dot_general(
        xv, w,
        dimension_numbers=(((1,), (1,)), ((), ())),
        preferred_element_type=jnp.float32)

    @pl.when(k == pl.num_programs(2) - 1)
    def _():
        b = bmu_ref[...] + bsig_ref[...] * beps_ref[...]
        o_ref[...] = (acc_ref[...] + b).astype(o_ref.dtype)


def _plain_kernel_3d(x_ref, wmu_ref, bmu_ref, o_ref, acc_ref, *, cast_bf16):
    k = pl.program_id(2)

    @pl.when(k == 0)
    def _():
        acc_ref[...] = jnp.zeros_like(acc_ref)

    w = wmu_ref[...]
    xv = x_ref[...]
    if cast_bf16:
        w = w.astype(jnp.bfloat16)
        xv = xv.astype(jnp.bfloat16)

    acc_ref[...] += lax.dot_general(
        xv, w,
        dimension_numbers=(((1,), (1,)), ((), ())),
        preferred_element_type=jnp.float32)

    @pl.when(k == pl.num_programs(2) - 1)
    def _():
        o_ref[...] = (acc_ref[...] + bmu_ref[...]).astype(o_ref.dtype)


# ----------------------------- wrapper ------------------------------------ #

def _round_up(x, m):
    return ((x + m - 1) // m) * m


def _pad2(a, rows, cols):
    return jnp.pad(a, ((0, rows - a.shape[0]), (0, cols - a.shape[1])))


def noisy_linear_forward(x, weight_mu, weight_sigma, epsilon_in, epsilon_out,
                         bias_mu, bias_sigma, bias_epsilon, *,
                         training=True, use_bf16_mxu=False):
    """Forward pass of NoisyLinear.

    x:               (B, in_features) f32
    weight_mu/sigma: (out_features, in_features) f32
    epsilon_in:      (in_features,)  factorized-noise vector (f(randn))
    epsilon_out:     (out_features,) factorized-noise vector (f(randn))
    bias_mu/sigma/epsilon: (out_features,)
    """
    B, in_f = x.shape
    out_f = weight_mu.shape[0]

    # Batch tile mult. of 8 (sublane), out/in tiles lane-dense (mult. of 128).
    tm = min(256, _round_up(B, 8))
    tn = min(512, _round_up(out_f, 128))
    tk = min(512, _round_up(in_f, 128))

    Mp = _round_up(B, tm)
    Np = _round_up(out_f, tn)
    Kp = _round_up(in_f, tk)
    single_k = (Kp == tk)            # whole reduction fits in one tile

    xp = _pad2(x, Mp, Kp)
    wmu = _pad2(weight_mu, Np, Kp)
    bmu = _pad2(bias_mu.reshape(1, out_f), 1, Np)

    out_shape = jax.ShapeDtypeStruct((Mp, Np), x.dtype)

    if single_k:
        grid = (Mp // tm, Np // tn)
        x_spec = pl.BlockSpec((tm, tk), lambda i, j: (i, 0))
        w_spec = pl.BlockSpec((tn, tk), lambda i, j: (j, 0))
        ein_spec = pl.BlockSpec((1, tk), lambda i, j: (0, 0))
        eout_spec = pl.BlockSpec((tn, 1), lambda i, j: (j, 0))
        brow_spec = pl.BlockSpec((1, tn), lambda i, j: (0, j))
        out_spec = pl.BlockSpec((tm, tn), lambda i, j: (i, j))
        scratch = []
        compiler_params = pltpu.CompilerParams(
            dimension_semantics=("parallel", "parallel"))
        noisy_kernel = functools.partial(_noisy_kernel_2d, cast_bf16=use_bf16_mxu)
        plain_kernel = functools.partial(_plain_kernel_2d, cast_bf16=use_bf16_mxu)
    else:
        grid = (Mp // tm, Np // tn, Kp // tk)       # reduction axis (k) last
        x_spec = pl.BlockSpec((tm, tk), lambda i, j, k: (i, k))
        w_spec = pl.BlockSpec((tn, tk), lambda i, j, k: (j, k))
        ein_spec = pl.BlockSpec((1, tk), lambda i, j, k: (0, k))
        eout_spec = pl.BlockSpec((tn, 1), lambda i, j, k: (j, 0))
        brow_spec = pl.BlockSpec((1, tn), lambda i, j, k: (0, j))
        out_spec = pl.BlockSpec((tm, tn), lambda i, j, k: (i, j))
        scratch = [pltpu.VMEM((tm, tn), jnp.float32)]
        compiler_params = pltpu.CompilerParams(
            dimension_semantics=("parallel", "parallel", "arbitrary"))
        noisy_kernel = functools.partial(_noisy_kernel_3d, cast_bf16=use_bf16_mxu)
        plain_kernel = functools.partial(_plain_kernel_3d, cast_bf16=use_bf16_mxu)

    if training:
        wsig = _pad2(weight_sigma, Np, Kp)
        ein = _pad2(epsilon_in.reshape(1, in_f), 1, Kp)          # (1, Kp) row
        eout = _pad2(epsilon_out.reshape(out_f, 1), Np, 1)       # (Np, 1) col
        bsig = _pad2(bias_sigma.reshape(1, out_f), 1, Np)
        beps = _pad2(bias_epsilon.reshape(1, out_f), 1, Np)

        out = pl.pallas_call(
            noisy_kernel,
            out_shape=out_shape,
            grid=grid,
            in_specs=[
                x_spec,        # x
                w_spec,        # weight_mu
                w_spec,        # weight_sigma
                ein_spec,      # epsilon_in row
                eout_spec,     # epsilon_out col
                brow_spec,     # bias_mu
                brow_spec,     # bias_sigma
                brow_spec,     # bias_epsilon
            ],
            out_specs=out_spec,
            scratch_shapes=scratch,
            compiler_params=compiler_params,
        )(xp, wmu, wsig, ein, eout, bmu, bsig, beps)
    else:
        out = pl.pallas_call(
            plain_kernel,
            out_shape=out_shape,
            grid=grid,
            in_specs=[x_spec, w_spec, brow_spec],
            out_specs=out_spec,
            scratch_shapes=scratch,
            compiler_params=compiler_params,
        )(xp, wmu, bmu)

    return out[:B, :out_f]


# ----------------------------- init glue ---------------------------------- #

def _scale_noise(key, size):
    # x = randn(size); x = sign(x) * sqrt(|x|)
    x = jax.random.normal(key, (size,), dtype=jnp.float32)
    return jnp.sign(x) * jnp.sqrt(jnp.abs(x))


def init_noisy_linear(key, in_features, out_features, sigma_init=0.4):
    """Matches reset_parameters() + reset_noise().  weight_epsilon is kept in
    factorized form (epsilon_out, epsilon_in); the kernel rebuilds the outer
    product per tile.  bias_epsilon is independent noise, as in the module."""
    k_wmu, k_bmu, k_ein, k_eout, k_beps = jax.random.split(key, 5)
    mu_range = 1.0 / math.sqrt(in_features)

    weight_mu = jax.random.uniform(
        k_wmu, (out_features, in_features), jnp.float32, -mu_range, mu_range)
    weight_sigma = jnp.full((out_features, in_features),
                            sigma_init / math.sqrt(in_features), jnp.float32)
    bias_mu = jax.random.uniform(
        k_bmu, (out_features,), jnp.float32, -mu_range, mu_range)
    bias_sigma = jnp.full((out_features,),
                          sigma_init / math.sqrt(out_features), jnp.float32)

    epsilon_in = _scale_noise(k_ein, in_features)
    epsilon_out = _scale_noise(k_eout, out_features)
    bias_epsilon = _scale_noise(k_beps, out_features)

    return dict(weight_mu=weight_mu, weight_sigma=weight_sigma,
                epsilon_in=epsilon_in, epsilon_out=epsilon_out,
                bias_mu=bias_mu, bias_sigma=bias_sigma,
                bias_epsilon=bias_epsilon)


# TODO(synk): sigma_loss() / get_sigma() are host-side scalar diagnostics over the
# parameters (mean of |sigma|); they are trivial jnp reductions and not kernelized.


if __name__ == "__main__":
    key = jax.random.PRNGKey(0)
    k_params, k_x = jax.random.split(key)

    in_features, out_features, batch = 32, 16, 8
    params = init_noisy_linear(k_params, in_features, out_features, sigma_init=0.4)
    x = jax.random.normal(k_x, (batch, in_features), dtype=jnp.float32)

    # ---- training mode (noisy weights) ----
    out_train = noisy_linear_forward(
        x, params["weight_mu"], params["weight_sigma"],
        params["epsilon_in"], params["epsilon_out"],
        params["bias_mu"], params["bias_sigma"], params["bias_epsilon"],
        training=True)
    out_train = jax.block_until_ready(out_train)

    w_ref = params["weight_mu"] + params["weight_sigma"] * jnp.outer(
        params["epsilon_out"], params["epsilon_in"])
    b_ref = params["bias_mu"] + params["bias_sigma"] * params["bias_epsilon"]
    ref_train = x @ w_ref.T + b_ref
    assert out_train.shape == (batch, out_features)
    assert jnp.allclose(out_train, ref_train, atol=1e-5, rtol=1e-5)

    # ---- eval mode (mu weights only, separate lean kernel) ----
    out_eval = noisy_linear_forward(
        x, params["weight_mu"], params["weight_sigma"],
        params["epsilon_in"], params["epsilon_out"],
        params["bias_mu"], params["bias_sigma"], params["bias_epsilon"],
        training=False)
    out_eval = jax.block_until_ready(out_eval)

    ref_eval = x @ params["weight_mu"].T + params["bias_mu"]
    assert out_eval.shape == (batch, out_features)
    assert jnp.allclose(out_eval, ref_eval, atol=1e-5, rtol=1e-5)

    # ---- exercise the multi-k (3-D grid, accumulator) path as well ----
    in_big, out_big, batch_big = 1024, 256, 32
    k_pb, k_xb = jax.random.split(jax.random.PRNGKey(1))
    pb = init_noisy_linear(k_pb, in_big, out_big, sigma_init=0.4)
    xb = jax.random.normal(k_xb, (batch_big, in_big), dtype=jnp.float32)
    out_big_res = jax.block_until_ready(noisy_linear_forward(
        xb, pb["weight_mu"], pb["weight_sigma"], pb["epsilon_in"],
        pb["epsilon_out"], pb["bias_mu"], pb["bias_sigma"], pb["bias_epsilon"],
        training=True))
    wb_ref = pb["weight_mu"] + pb["weight_sigma"] * jnp.outer(
        pb["epsilon_out"], pb["epsilon_in"])
    bb_ref = pb["bias_mu"] + pb["bias_sigma"] * pb["bias_epsilon"]
    ref_big = xb @ wb_ref.T + bb_ref
    assert jnp.allclose(out_big_res, ref_big, atol=1e-4, rtol=1e-4)

    print("KERNEL_OK")
</pallas_src>

<mosaic_0001>
module attributes {stable_mosaic.version = 11 : i64} {
  func.func @_noisy_kernel_2d(%arg0: i32, %arg1: i32, %arg2: memref<8x128xf32, #tpu.memory_space<vmem>>, %arg3: memref<128x128xf32, #tpu.memory_space<vmem>>, %arg4: memref<128x128xf32, #tpu.memory_space<vmem>>, %arg5: memref<1x128xf32, #tpu.memory_space<vmem>>, %arg6: memref<128x1xf32, #tpu.memory_space<vmem>>, %arg7: memref<1x128xf32, #tpu.memory_space<vmem>>, %arg8: memref<1x128xf32, #tpu.memory_space<vmem>>, %arg9: memref<1x128xf32, #tpu.memory_space<vmem>>, %arg10: memref<8x128xf32, #tpu.memory_space<vmem>>) attributes {dimension_semantics = [#tpu.dimension_semantics<parallel>, #tpu.dimension_semantics<parallel>], iteration_bounds = array<i64: 1, 1>, scalar_prefetch = 0 : i64, scratch_operands = 0 : i64, tpu.core_type = #tpu.core_type<tc>, window_params = [{transform_indices = @transform_0, window_bounds = array<i64: 8, 128>}, {transform_indices = @transform_1, window_bounds = array<i64: 128, 128>}, {transform_indices = @transform_2, window_bounds = array<i64: 128, 128>}, {pipeline_mode = #tpu.pipeline_mode<synchronous>, transform_indices = @transform_3, window_bounds = array<i64: 1, 128>}, {transform_indices = @transform_4, window_bounds = array<i64: 128, 1>}, {transform_indices = @transform_5, window_bounds = array<i64: 1, 128>}, {transform_indices = @transform_6, window_bounds = array<i64: 1, 128>}, {transform_indices = @transform_7, window_bounds = array<i64: 1, 128>}, {transform_indices = @transform_8, window_bounds = array<i64: 8, 128>}]} {
    %c0 = arith.constant 0 : index
    %c0_0 = arith.constant 0 : index
    %0 = vector.load %arg3[%c0, %c0_0] : memref<128x128xf32, #tpu.memory_space<vmem>>, vector<128x128xf32>
    %c0_1 = arith.constant 0 : index
    %c0_2 = arith.constant 0 : index
    %1 = vector.load %arg4[%c0_1, %c0_2] : memref<128x128xf32, #tpu.memory_space<vmem>>, vector<128x128xf32>
    %c0_3 = arith.constant 0 : index
    %c0_4 = arith.constant 0 : index
    %2 = vector.load %arg6[%c0_3, %c0_4] : memref<128x1xf32, #tpu.memory_space<vmem>>, vector<128x1xf32>
    %c0_5 = arith.constant 0 : index
    %c0_6 = arith.constant 0 : index
    %3 = vector.load %arg5[%c0_5, %c0_6] : memref<1x128xf32, #tpu.memory_space<vmem>>, vector<1x128xf32>
    %4 = vector.broadcast %2 : vector<128x1xf32> to vector<128x128xf32>
    %5 = vector.broadcast %3 : vector<1x128xf32> to vector<128x128xf32>
    %6 = arith.mulf %4, %5 : vector<128x128xf32>
    %7 = arith.mulf %1, %6 : vector<128x128xf32>
    %8 = arith.addf %0, %7 : vector<128x128xf32>
    %c0_7 = arith.constant 0 : index
    %c0_8 = arith.constant 0 : index
    %9 = vector.load %arg2[%c0_7, %c0_8] : memref<8x128xf32, #tpu.memory_space<vmem>>, vector<8x128xf32>
    %cst = arith.constant dense<0.000000e+00> : vector<8x128xf32>
    %10 = tpu.matmul %9, %8, %cst {dimension_numbers = #tpu.dot_dimension_numbers<[1], [1], [0], [0], [0, 0, 1, 0], [], []>} : vector<8x128xf32>, vector<128x128xf32>, vector<8x128xf32> -> vector<8x128xf32>
    %c0_9 = arith.constant 0 : index
    %c0_10 = arith.constant 0 : index
    %11 = vector.load %arg7[%c0_9, %c0_10] : memref<1x128xf32, #tpu.memory_space<vmem>>, vector<1x128xf32>
    %c0_11 = arith.constant 0 : index
    %c0_12 = arith.constant 0 : index
    %12 = vector.load %arg8[%c0_11, %c0_12] : memref<1x128xf32, #tpu.memory_space<vmem>>, vector<1x128xf32>
    %c0_13 = arith.constant 0 : index
    %c0_14 = arith.constant 0 : index
    %13 = vector.load %arg9[%c0_13, %c0_14] : memref<1x128xf32, #tpu.memory_space<vmem>>, vector<1x128xf32>
    %14 = arith.mulf %12, %13 : vector<1x128xf32>
    %15 = arith.addf %11, %14 : vector<1x128xf32>
    %16 = vector.broadcast %15 : vector<1x128xf32> to vector<8x128xf32>
    %17 = arith.addf %10, %16 : vector<8x128xf32>
    %c0_15 = arith.constant 0 : index
    %c0_16 = arith.constant 0 : index
    %18 = vector.load %arg10[%c0_15, %c0_16] : memref<8x128xf32, #tpu.memory_space<vmem>>, vector<8x128xf32>
    tpu.vector_store %arg10[%c0_15, %c0_16], %17 {strides = array<i32>} : memref<8x128xf32, #tpu.memory_space<vmem>>, vector<8x128xf32>,
    return
  }
  func.func @transform_0(%arg0: i32, %arg1: i32) -> (i32, i32) {
    %c0_i32 = arith.constant 0 : i32
    %c0_i32_0 = arith.constant 0 : i32
    return %arg0, %c0_i32 : i32, i32
  }
  func.func @transform_1(%arg0: i32, %arg1: i32) -> (i32, i32) {
    %c0_i32 = arith.constant 0 : i32
    %c0_i32_0 = arith.constant 0 : i32
    return %arg1, %c0_i32 : i32, i32
  }
  func.func @transform_2(%arg0: i32, %arg1: i32) -> (i32, i32) {
    %c0_i32 = arith.constant 0 : i32
    %c0_i32_0 = arith.constant 0 : i32
    return %arg1, %c0_i32 : i32, i32
  }
  func.func @transform_3(%arg0: i32, %arg1: i32) -> (i32, i32) {
    %c0_i32 = arith.constant 0 : i32
    %c0_i32_0 = arith.constant 0 : i32
    %c0_i32_1 = arith.constant 0 : i32
    return %c0_i32, %c0_i32_0 : i32, i32
  }
  func.func @transform_4(%arg0: i32, %arg1: i32) -> (i32, i32) {
    %c0_i32 = arith.constant 0 : i32
    %c0_i32_0 = arith.constant 0 : i32
    return %arg1, %c0_i32 : i32, i32
  }
  func.func @transform_5(%arg0: i32, %arg1: i32) -> (i32, i32) {
    %c0_i32 = arith.constant 0 : i32
    %c0_i32_0 = arith.constant 0 : i32
    return %c0_i32, %arg1 : i32, i32
  }
  func.func @transform_6(%arg0: i32, %arg1: i32) -> (i32, i32) {
    %c0_i32 = arith.constant 0 : i32
    %c0_i32_0 = arith.constant 0 : i32
    return %c0_i32, %arg1 : i32, i32
  }
  func.func @transform_7(%arg0: i32, %arg1: i32) -> (i32, i32) {
    %c0_i32 = arith.constant 0 : i32
    %c0_i32_0 = arith.constant 0 : i32
    return %c0_i32, %arg1 : i32, i32
  }
  func.func @transform_8(%arg0: i32, %arg1: i32) -> (i32, i32) {
    %c0_i32 = arith.constant 0 : i32
    return %arg0, %arg1 : i32, i32
  }
}

</mosaic_0001>

<llo_original>
// kernel: tpu_custom_call.1
$region0: #{tpu_custom_call.1}
  #allocation0 [shape = 'u32[]', space=smem, size = 0x4, offset = 0x4, fixed_abs, tag = 'smem constant byte address 0x4 - core index']
  #allocation1 [shape = 'u32[144,128]{1,0:T(1,128)}', space=vmem, size = 0x12000, scoped, tag = 'internal scratch']
  %s0 = inlined_call_operand.hbm [shape: f32[8,128], index: 0, kind: input, shape index: {}]
  %s1 = inlined_call_operand.vmem [shape: f32[128,128], index: 1, kind: input, shape index: {}]
  %s2 = inlined_call_operand.hbm [shape: f32[128,128], index: 2, kind: input, shape index: {}]
  %s3 = inlined_call_operand.vmem [shape: f32[1,128], index: 3, kind: input, shape index: {}]
  %s4 = inlined_call_operand.vmem [shape: f32[128,1], index: 4, kind: input, shape index: {}]
  %s5 = inlined_call_operand.vmem [shape: f32[1,128], index: 5, kind: input, shape index: {}]
  %s6 = inlined_call_operand.vmem [shape: f32[1,128], index: 6, kind: input, shape index: {}]
  %s7 = inlined_call_operand.vmem [shape: f32[1,128], index: 7, kind: input, shape index: {}]
  %s8 = inlined_call_operand.hbm [shape: f32[8,128], index: 8, kind: output, shape index: {}]
  %s9 = sld [smem:[#allocation0]]
  $region50: #{tpu_custom_call.1} parent=0
    _
  %s11 = ssub.s32 1, %s9
  %s12 = scalar_select 0, %s11, %s9
  $region1: #{tpu_custom_call.1} parent=0
    #allocation2 [shape = 'u8[4096]{0}', space=vmem, size = 0x1000, scoped, tag = 'input window, operand 0, single buffered']
    #allocation3 [shape = 's32[1]{0}', space=sflag, size = 0x4, scoped, tag = 'scoped memory for tpu_custom_call.1']
    #allocation4 [shape = 's32[1]{0}', space=sflag, size = 0x4, scoped, tag = 'scoped memory for tpu_custom_call.1']
    #allocation5 [shape = 'u8[65536]{0}', space=vmem, size = 0x10000, scoped, tag = 'input window, operand 2, single buffered']
    #allocation6 [shape = 's32[1]{0}', space=sflag, size = 0x4, scoped, tag = 'scoped memory for tpu_custom_call.1']
    #allocation7 [shape = 'u8[4096]{0}', space=vmem, size = 0x1000, scoped, tag = 'output window, operand 0, single buffered']
    %13 = vsyncpa [#allocation3], 0
    %14 = vsyncpa [#allocation6], 0
    %15 = vsyncpa [#allocation4], 0
    // Predicated region
    $region2: #{tpu_custom_call.1} parent=1 // pred_check
      _
    $region3: #{tpu_custom_call.1} parent=1 // pred_check_branch
      %17 = sbr.rel (0) target = $region5
    $region4: #{tpu_custom_call.1} parent=1 // pred_region
      %s19 = ssub.s32 128, 128
      %20 = vsyncadd [#allocation3], %s19
      %s22 = sshll.u32 [#allocation2], 4
      %s23 = int_to_ptr.vmem [resolvable:$true] %s22
      %25 = dma.hbm_to_vmem [thread:$0]  %s0, 128, %s23, [#allocation3]
    $region5: #{tpu_custom_call.1} parent=1 // pred_fallthru
      _
    // Predicated region
    $region6: #{tpu_custom_call.1} parent=1 // pred_check
      _
    $region7: #{tpu_custom_call.1} parent=1 // pred_check_branch
      %27 = sbr.rel (0) target = $region9
    $region8: #{tpu_custom_call.1} parent=1 // pred_region
      _
    $region9: #{tpu_custom_call.1} parent=1 // pred_fallthru
      _
    // Predicated region
    $region10: #{tpu_custom_call.1} parent=1 // pred_check
      _
    $region11: #{tpu_custom_call.1} parent=1 // pred_check_branch
      %29 = sbr.rel (0) target = $region13
    $region12: #{tpu_custom_call.1} parent=1 // pred_region
      %s31 = ssub.s32 2048, 2048
      %32 = vsyncadd [#allocation6], %s31
      %s33 = sshll.u32 [#allocation5], 4
      %s34 = int_to_ptr.vmem [resolvable:$true] %s33
      %39 = dma.hbm_to_vmem [thread:$0]  %s2, 2048, %s34, [#allocation6], 128, 128, 8
    $region13: #{tpu_custom_call.1} parent=1 // pred_fallthru
      _
    // Predicated region
    $region14: #{tpu_custom_call.1} parent=1 // pred_check
      _
    $region15: #{tpu_custom_call.1} parent=1 // pred_check_branch
      %41 = sbr.rel (0) target = $region17
    $region16: #{tpu_custom_call.1} parent=1 // pred_region
      _
    $region17: #{tpu_custom_call.1} parent=1 // pred_fallthru
      _
    // Predicated region
    $region18: #{tpu_custom_call.1} parent=1 // pred_check
      _
    $region19: #{tpu_custom_call.1} parent=1 // pred_check_branch
      %43 = sbr.rel (0) target = $region21
    $region20: #{tpu_custom_call.1} parent=1 // pred_region
      _
    $region21: #{tpu_custom_call.1} parent=1 // pred_fallthru
      _
    // Predicated region
    $region22: #{tpu_custom_call.1} parent=1 // pred_check
      _
    $region23: #{tpu_custom_call.1} parent=1 // pred_check_branch
      %45 = sbr.rel (0) target = $region25
    $region24: #{tpu_custom_call.1} parent=1 // pred_region
      _
    $region25: #{tpu_custom_call.1} parent=1 // pred_fallthru
      _
    // Predicated region
    $region26: #{tpu_custom_call.1} parent=1 // pred_check
      _
    $region27: #{tpu_custom_call.1} parent=1 // pred_check_branch
      %47 = sbr.rel (0) target = $region29
    $region28: #{tpu_custom_call.1} parent=1 // pred_region
      _
    $region29: #{tpu_custom_call.1} parent=1 // pred_fallthru
      _
    // Predicated region
    $region30: #{tpu_custom_call.1} parent=1 // pred_check
      _
    $region31: #{tpu_custom_call.1} parent=1 // pred_check_branch
      %49 = sbr.rel (0) target = $region33
    $region32: #{tpu_custom_call.1} parent=1 // pred_region
      _
    $region33: #{tpu_custom_call.1} parent=1 // pred_fallthru
      _
    // Predicated region
    $region34: #{tpu_custom_call.1} parent=1 // pred_check
      _
    $region35: #{tpu_custom_call.1} parent=1 // pred_check_branch
      %51 = sbr.rel (0) target = $region37
    $region36: #{tpu_custom_call.1} parent=1 // pred_region
      %52 = dma.done [#allocation3], 128
    $region37: #{tpu_custom_call.1} parent=1 // pred_fallthru
      _
    // Predicated region
    $region38: #{tpu_custom_call.1} parent=1 // pred_check
      _
    $region39: #{tpu_custom_call.1} parent=1 // pred_check_branch
      %54 = sbr.rel (0) target = $region41
    $region40: #{tpu_custom_call.1} parent=1 // pred_region
      %55 = dma.done [#allocation6], 2048
    $region41: #{tpu_custom_call.1} parent=1 // pred_fallthru
      _
    %v56 = vld [vmem:[%s1] sm:$0xff]
    %v57 = vld [vmem:[%s1 + $0x8] sm:$0xff]
    %v58 = vld [vmem:[%s1 + $0x10] sm:$0xff]
    %v59 = vld [vmem:[%s1 + $0x18] sm:$0xff]
    %v60 = vld [vmem:[%s1 + $0x20] sm:$0xff]
    %v61 = vld [vmem:[%s1 + $0x28] sm:$0xff]
    %v62 = vld [vmem:[%s1 + $0x30] sm:$0xff]
    %v63 = vld [vmem:[%s1 + $0x38] sm:$0xff]
    %v64 = vld [vmem:[%s1 + $0x40] sm:$0xff]
    %v65 = vld [vmem:[%s1 + $0x48] sm:$0xff]
    %v66 = vld [vmem:[%s1 + $0x50] sm:$0xff]
    %v67 = vld [vmem:[%s1 + $0x58] sm:$0xff]
    %v68 = vld [vmem:[%s1 + $0x60] sm:$0xff]
    %v69 = vld [vmem:[%s1 + $0x68] sm:$0xff]
    %v70 = vld [vmem:[%s1 + $0x70] sm:$0xff]
    %v71 = vld [vmem:[%s1 + $0x78] sm:$0xff]
    %v72 = vld [vmem:[#allocation5] sm:$0xff]
    %v73 = vld [vmem:[#allocation5 + $0x8] sm:$0xff]
    %v74 = vld [vmem:[#allocation5 + $0x10] sm:$0xff]
    %v75 = vld [vmem:[#allocation5 + $0x18] sm:$0xff]
    %v76 = vld [vmem:[#allocation5 + $0x20] sm:$0xff]
    %v77 = vld [vmem:[#allocation5 + $0x28] sm:$0xff]
    %v78 = vld [vmem:[#allocation5 + $0x30] sm:$0xff]
    %v79 = vld [vmem:[#allocation5 + $0x38] sm:$0xff]
    %v80 = vld [vmem:[#allocation5 + $0x40] sm:$0xff]
    %v81 = vld [vmem:[#allocation5 + $0x48] sm:$0xff]
    %v82 = vld [vmem:[#allocation5 + $0x50] sm:$0xff]
    %v83 = vld [vmem:[#allocation5 + $0x58] sm:$0xff]
    %v84 = vld [vmem:[#allocation5 + $0x60] sm:$0xff]
    %v85 = vld [vmem:[#allocation5 + $0x68] sm:$0xff]
    %v86 = vld [vmem:[#allocation5 + $0x70] sm:$0xff]
    %v87 = vld [vmem:[#allocation5 + $0x78] sm:$0xff]
    %v88 = vld [vmem:[%s4] sm:$0xff]
    %v89 = vld [vmem:[%s4 + $0x8] sm:$0xff]
    %v90 = vld [vmem:[%s4 + $0x10] sm:$0xff]
    %v91 = vld [vmem:[%s4 + $0x18] sm:$0xff]
    %v92 = vld [vmem:[%s4 + $0x20] sm:$0xff]
    %v93 = vld [vmem:[%s4 + $0x28] sm:$0xff]
    %v94 = vld [vmem:[%s4 + $0x30] sm:$0xff]
    %v95 = vld [vmem:[%s4 + $0x38] sm:$0xff]
    %v96 = vld [vmem:[%s4 + $0x40] sm:$0xff]
    %v97 = vld [vmem:[%s4 + $0x48] sm:$0xff]
    %v98 = vld [vmem:[%s4 + $0x50] sm:$0xff]
    %v99 = vld [vmem:[%s4 + $0x58] sm:$0xff]
    %v100 = vld [vmem:[%s4 + $0x60] sm:$0xff]
    %v101 = vld [vmem:[%s4 + $0x68] sm:$0xff]
    %v102 = vld [vmem:[%s4 + $0x70] sm:$0xff]
    %v103 = vld [vmem:[%s4 + $0x78] sm:$0xff]
    %v104 = vld [vmem:[%s3] sm:$0x1]
    %106 = vset.pattern.permute.xlu0 0
    %107 = vperm.xlu0 %106, %v88
    %v108 = vpop.permute.xlu0 %107
    %111 = vset.pattern.permute.xlu0 0
    %112 = vperm.xlu0 %111, %v89
    %v113 = vpop.permute.xlu0 %112
    %116 = vset.pattern.permute.xlu0 0
    %117 = vperm.xlu0 %116, %v90
    %v118 = vpop.permute.xlu0 %117
    %121 = vset.pattern.permute.xlu0 0
    %122 = vperm.xlu0 %121, %v91
    %v123 = vpop.permute.xlu0 %122
    %126 = vset.pattern.permute.xlu0 0
    %127 = vperm.xlu0 %126, %v92
    %v128 = vpop.permute.xlu0 %127
    %131 = vset.pattern.permute.xlu0 0
    %132 = vperm.xlu0 %131, %v93
    %v133 = vpop.permute.xlu0 %132
    %136 = vset.pattern.permute.xlu0 0
    %137 = vperm.xlu0 %136, %v94
    %v138 = vpop.permute.xlu0 %137
    %141 = vset.pattern.permute.xlu0 0
    %142 = vperm.xlu0 %141, %v95
    %v143 = vpop.permute.xlu0 %142
    %146 = vset.pattern.permute.xlu0 0
    %147 = vperm.xlu0 %146, %v96
    %v148 = vpop.permute.xlu0 %147
    %151 = vset.pattern.permute.xlu0 0
    %152 = vperm.xlu0 %151, %v97
    %v153 = vpop.permute.xlu0 %152
    %156 = vset.pattern.permute.xlu0 0
    %157 = vperm.xlu0 %156, %v98
    %v158 = vpop.permute.xlu0 %157
    %161 = vset.pattern.permute.xlu0 0
    %162 = vperm.xlu0 %161, %v99
    %v163 = vpop.permute.xlu0 %162
    %166 = vset.pattern.permute.xlu0 0
    %167 = vperm.xlu0 %166, %v100
    %v168 = vpop.permute.xlu0 %167
    %171 = vset.pattern.permute.xlu0 0
    %172 = vperm.xlu0 %171, %v101
    %v173 = vpop.permute.xlu0 %172
    %176 = vset.pattern.permute.xlu0 0
    %177 = vperm.xlu0 %176, %v102
    %v178 = vpop.permute.xlu0 %177
    %181 = vset.pattern.permute.xlu0 0
    %182 = vperm.xlu0 %181, %v103
    %v183 = vpop.permute.xlu0 %182
    %v186 = vlaneseq
    %v187 = vshrl.u32 %v186, 7
    %v188 = vsub.s32 0, %v187
    %v189 = vrot.slane %v104, %v188
    %v191 = vmul.f32 %v108, %v189
    %v192 = vmul.f32 %v113, %v189
    %v193 = vmul.f32 %v118, %v189
    %v194 = vmul.f32 %v123, %v189
    %v195 = vmul.f32 %v128, %v189
    %v196 = vmul.f32 %v133, %v189
    %v197 = vmul.f32 %v138, %v189
    %v198 = vmul.f32 %v143, %v189
    %v199 = vmul.f32 %v148, %v189
    %v200 = vmul.f32 %v153, %v189
    %v201 = vmul.f32 %v158, %v189
    %v202 = vmul.f32 %v163, %v189
    %v203 = vmul.f32 %v168, %v189
    %v204 = vmul.f32 %v173, %v189
    %v205 = vmul.f32 %v178, %v189
    %v206 = vmul.f32 %v183, %v189
    %v207 = vmul.f32 %v72, %v191
    %v208 = vmul.f32 %v73, %v192
    %v209 = vmul.f32 %v74, %v193
    %v210 = vmul.f32 %v75, %v194
    %v211 = vmul.f32 %v76, %v195
    %v212 = vmul.f32 %v77, %v196
    %v213 = vmul.f32 %v78, %v197
    %v214 = vmul.f32 %v79, %v198
    %v215 = vmul.f32 %v80, %v199
    %v216 = vmul.f32 %v81, %v200
    %v217 = vmul.f32 %v82, %v201
    %v218 = vmul.f32 %v83, %v202
    %v219 = vmul.f32 %v84, %v203
    %v220 = vmul.f32 %v85, %v204
    %v221 = vmul.f32 %v86, %v205
    %v222 = vmul.f32 %v87, %v206
    %v223 = vadd.f32 %v56, %v207
    %v224 = vadd.f32 %v57, %v208
    %v225 = vadd.f32 %v58, %v209
    %v226 = vadd.f32 %v59, %v210
    %v227 = vadd.f32 %v60, %v211
    %v228 = vadd.f32 %v61, %v212
    %v229 = vadd.f32 %v62, %v213
    %v230 = vadd.f32 %v63, %v214
    %v231 = vadd.f32 %v64, %v215
    %v232 = vadd.f32 %v65, %v216
    %v233 = vadd.f32 %v66, %v217
    %v234 = vadd.f32 %v67, %v218
    %v235 = vadd.f32 %v68, %v219
    %v236 = vadd.f32 %v69, %v220
    %v237 = vadd.f32 %v70, %v221
    %v238 = vadd.f32 %v71, %v222
    %v239 = vld [vmem:[#allocation2] sm:$0xff]
    %v240 = vld [vmem:[%s5] sm:$0x1]
    %v241 = vld [vmem:[%s6] sm:$0x1]
    %v242 = vld [vmem:[%s7] sm:$0x1]
    %v243 = vmul.f32 %v241, %v242
    %v244 = vadd.f32 %v240, %v243
    %v246 = vlaneseq
    %v247 = vshrl.u32 %v246, 7
    %v248 = vsub.s32 0, %v247
    %v249 = vrot.slane %v244, %v248
    %251 = vmatprep.subr.mxu0 0.0
    %252 = vmatpush1.xpose.msra.mxu0 %v223
    %253 = vmatprep.subr.mxu0 0.0
    %254 = vmatpush1.xpose.msra.mxu0 %v224
    %255 = vmatprep.subr.mxu0 0.0
    %256 = vmatpush1.xpose.msra.mxu0 %v225
    %257 = vmatprep.subr.mxu0 0.0
    %258 = vmatpush1.xpose.msra.mxu0 %v226
    %259 = vmatprep.subr.mxu0 0.0
    %260 = vmatpush1.xpose.msra.mxu0 %v227
    %261 = vmatprep.subr.mxu0 0.0
    %262 = vmatpush1.xpose.msra.mxu0 %v228
    %263 = vmatprep.subr.mxu0 0.0
    %264 = vmatpush1.xpose.msra.mxu0 %v229
    %265 = vmatprep.subr.mxu0 0.0
    %266 = vmatpush1.xpose.msra.mxu0 %v230
    %267 = vmatprep.subr.mxu0 0.0
    %268 = vmatpush1.xpose.msra.mxu0 %v231
    %269 = vmatprep.subr.mxu0 0.0
    %270 = vmatpush1.xpose.msra.mxu0 %v232
    %271 = vmatprep.subr.mxu0 0.0
    %272 = vmatpush1.xpose.msra.mxu0 %v233
    %273 = vmatprep.subr.mxu0 0.0
    %274 = vmatpush1.xpose.msra.mxu0 %v234
    %275 = vmatprep.subr.mxu0 0.0
    %276 = vmatpush1.xpose.msra.mxu0 %v235
    %277 = vmatprep.subr.mxu0 0.0
    %278 = vmatpush1.xpose.msra.mxu0 %v236
    %279 = vmatprep.subr.mxu0 0.0
    %280 = vmatpush1.xpose.msra.mxu0 %v237
    %281 = vmatprep.subr.mxu0 0.0
    %282 = vmatpush1.xpose.msra.mxu0 %v238
    %283 = vmatprep.subr.mxu0 0.0
    %284 = vmatpush1.xpose.msra.mxu0 0.0
    %285 = vmatprep.subr.mxu0 0.0
    %286 = vmatpush1.xpose.msra.mxu0 0.0
    %287 = vmatprep.subr.mxu0 0.0
    %288 = vmatpush1.xpose.msra.mxu0 0.0
    %289 = vmatprep.subr.mxu0 0.0
    %290 = vmatpush1.xpose.msra.mxu0 0.0
    %291 = vmatprep.subr.mxu0 0.0
    %292 = vmatpush1.xpose.msra.mxu0 0.0
    %293 = vmatprep.subr.mxu0 0.0
    %294 = vmatpush1.xpose.msra.mxu0 0.0
    %295 = vmatprep.subr.mxu0 0.0
    %296 = vmatpush1.xpose.msra.mxu0 0.0
    %297 = vmatprep.subr.mxu0 0.0
    %298 = vmatpush1.xpose.msra.mxu0 0.0
    %299 = vmatprep.subr.mxu0 0.0
    %300 = vmatpush1.xpose.msra.mxu0 0.0
    %301 = vmatprep.subr.mxu0 0.0
    %302 = vmatpush1.xpose.msra.mxu0 0.0
    %303 = vmatprep.subr.mxu0 0.0
    %304 = vmatpush1.xpose.msra.mxu0 0.0
    %305 = vmatprep.subr.mxu0 0.0
    %306 = vmatpush1.xpose.msra.mxu0 0.0
    %307 = vmatprep.subr.mxu0 0.0
    %308 = vmatpush1.xpose.msra.mxu0 0.0
    %309 = vmatprep.subr.mxu0 0.0
    %310 = vmatpush1.xpose.msra.mxu0 0.0
    %311 = vmatprep.subr.mxu0 0.0
    %312 = vmatpush1.xpose.msra.mxu0 0.0
    %313 = vmatprep.subr.mxu0 0.0
    %314 = vmatpush1.xpose.msra.mxu0 0.0
    %315 = vmatprep.mubr.f32.mxu0 0.0
    %316 = vmatmul.mubr.f32.gmra.mrb[0].mxu0 %v239
    %v317 = vpop.f32.mrb[0].mxu0
    %v318 = vadd.f32 %v249, %v317
    %v319 = vpop.f32.mrb[0].mxu0
    %320 = vdwg.mxu0
    %321 = vst [vmem:[#allocation7] sm:$0xff] %v318
    // Predicated region
    $region42: #{tpu_custom_call.1} parent=1 // pred_check
      _
    $region43: #{tpu_custom_call.1} parent=1 // pred_check_branch
      %323 = sbr.rel (0) target = $region45
    $region44: #{tpu_custom_call.1} parent=1 // pred_region
      %s325 = ssub.s32 128, 128
      %326 = vsyncadd [#allocation4], %s325
      %s328 = sshll.u32 [#allocation7], 4
      %s329 = int_to_ptr.vmem [resolvable:$true] %s328
      %331 = dma.vmem_to_hbm [thread:$0]  %s329, 128, %s8, [#allocation4]
    $region45: #{tpu_custom_call.1} parent=1 // pred_fallthru
      _
    // Predicated region
    $region46: #{tpu_custom_call.1} parent=1 // pred_check
      _
    $region47: #{tpu_custom_call.1} parent=1 // pred_check_branch
      %333 = sbr.rel (0) target = $region49
    $region48: #{tpu_custom_call.1} parent=1 // pred_region
      %334 = dma.done [#allocation4], 128
    $region49: #{tpu_custom_call.1} parent=1 // pred_fallthru
      _
    %335 = vsyncpa [#allocation3], 1
    %336 = vsyncpa [#allocation6], 1
    %337 = vsyncpa [#allocation4], 1

</llo_original>
